<compile_context>
chip_gen: v7x
topology: tpu7x:2x2x1
jax: 0.10.0
libtpu: 0.0.40
codegen_flags: <defaults>
</compile_context>

<pallas_src>
import functools
import math
import time

import jax
import jax.numpy as jnp
from jax.experimental import pallas as pl
from jax.experimental.pallas import tpu as pltpu


_SMALL_BYTES = 1 << 20          # fast-path threshold (per input)
_TARGET_TILE_BYTES = 4 << 20    # per-input tile size target for the tiled path


def _mse_small_kernel(pred_ref, oracle_ref, out_ref, *, inv_n):
    """Single-block MSE: whole (small) arrays in VMEM, scalar result to SMEM."""
    d = pred_ref[...].astype(jnp.float32) - oracle_ref[...].astype(jnp.float32)
    out_ref[0] = jnp.sum(d * d) * inv_n


def _mse_tiled_kernel(pred_ref, oracle_ref, out_ref, acc_ref, *,
                      inv_n, rows_valid, ragged):
    """Row-tiled MSE reduction with an (8, Q) VMEM accumulator."""
    i = pl.program_id(0)

    @pl.when(i == 0)
    def _():
        acc_ref[...] = jnp.zeros_like(acc_ref)

    tile, q = pred_ref.shape
    d = pred_ref[...].astype(jnp.float32) - oracle_ref[...].astype(jnp.float32)
    d2 = d * d
    if ragged:
        # Mask rows past the true row count (last tile may read out-of-bounds
        # block contents, which are undefined).  jnp.where selects 0.0, so any
        # garbage (even NaN/Inf) cannot leak into the sum.
        row = jax.lax.broadcasted_iota(jnp.int32, (tile, q), 0) + i * tile
        d2 = jnp.where(row < rows_valid, d2, 0.0)

    # Fold row-groups into the (8, Q) accumulator: layout-preserving reshape
    # followed by elementwise adds over the leading axis (pure VPU work).
    acc_ref[...] += d2.reshape(tile // 8, 8, q).sum(axis=0)

    @pl.when(i == pl.num_programs(0) - 1)
    def _():
        # Single cross-lane/sublane reduce (XLU), once, then scalar to SMEM.
        out_ref[0] = jnp.sum(acc_ref[...]) * inv_n


def _lane_dense_view(flat, n):
    """View a flat length-n array as (rows, Q) with Q a multiple of 128.

    Picks the largest Q in (512, 256, 128) that divides n so the reshape is
    metadata-only (no copy).  Only if none divides, pads <= 127 trailing zeros
    (zeros contribute 0 to the squared-diff sum).
    """
    for q in (512, 256, 128):
        if n % q == 0:
            return flat.reshape(n // q, q), n // q, q
    q = 128
    pad = (-n) % q
    flat = jnp.pad(flat, (0, pad))
    rows = (n + pad) // q
    return flat.reshape(rows, q), rows, q


@jax.jit
def mse_loss_pallas(pred, oracle):
    """Mean-squared-error over all elements, computed in a Pallas kernel."""
    assert pred.shape == oracle.shape
    n = math.prod(pred.shape)
    inv_n = 1.0 / float(n)
    itemsize = pred.dtype.itemsize

    flat_p = pred.reshape(-1)
    flat_o = oracle.reshape(-1)
    p2, rows, q = _lane_dense_view(flat_p, n)
    o2, _, _ = _lane_dense_view(flat_o, n)

    if n * itemsize <= _SMALL_BYTES:
        # ---- Small-input fast path: one block, no grid, no scratch. ----
        out = pl.pallas_call(
            functools.partial(_mse_small_kernel, inv_n=inv_n),
            out_shape=jax.ShapeDtypeStruct((1,), jnp.float32),
            in_specs=[
                pl.BlockSpec(memory_space=pltpu.MemorySpace.VMEM),
                pl.BlockSpec(memory_space=pltpu.MemorySpace.VMEM),
            ],
            out_specs=pl.BlockSpec(memory_space=pltpu.MemorySpace.SMEM),
        )(p2, o2)
        return out[0]

    # ---- Large-input tiled path (HBM-bound pipelined reduction). ----
    # Row tile sized to ~_TARGET_TILE_BYTES per input, multiple of 8 sublanes,
    # never larger than the array (ragged remainder handled by in-kernel mask).
    target_rows = max(8, (_TARGET_TILE_BYTES // (q * itemsize)) // 8 * 8)
    tile = max(8, min(target_rows, (rows // 8) * 8))
    num_tiles = -(-rows // tile)
    ragged = num_tiles * tile > rows

    in_tile_bytes = tile * q * itemsize
    f32_tile_bytes = tile * q * 4
    # 2 inputs x 2 pipeline buffers + fused f32 intermediates + headroom.
    vmem_limit = 4 * in_tile_bytes + 2 * f32_tile_bytes + (4 << 20)
    vmem_limit = min(int(vmem_limit), 48 << 20)

    kernel = functools.partial(
        _mse_tiled_kernel, inv_n=inv_n, rows_valid=rows, ragged=ragged)

    out = pl.pallas_call(
        kernel,
        out_shape=jax.ShapeDtypeStruct((1,), jnp.float32),
        grid=(num_tiles,),
        in_specs=[
            pl.BlockSpec((tile, q), lambda i: (i, 0)),
            pl.BlockSpec((tile, q), lambda i: (i, 0)),
        ],
        out_specs=pl.BlockSpec(memory_space=pltpu.MemorySpace.SMEM),
        scratch_shapes=[pltpu.VMEM((8, q), jnp.float32)],
        compiler_params=pltpu.CompilerParams(
            dimension_semantics=("arbitrary",),
            vmem_limit_bytes=vmem_limit,
        ),
    )(p2, o2)
    return out[0]


class RLStatistics:
    """Minimal port of the PyTorch RLStatistics accumulator."""

    def __init__(self, loss=0.0, reward=0.0, n_words=0):
        self.loss = loss  # may hold a device scalar; converted lazily by user
        self.n_words = n_words
        self.n_src_words = 0
        self.reward = reward
        self.start_time = time.time()

    def update(self, stat):
        self.loss += stat.loss
        self.n_words += stat.n_words
        self.reward += stat.reward

    def mean_loss(self):
        return self.loss / self.n_words

    def mean_reward(self):
        return self.reward / self.n_words

    def elapsed_time(self):
        return time.time() - self.start_time


class SimpleCriticLoss:
    """JAX/Pallas port of craigslistbargain SimpleCriticLoss.forward."""

    def __call__(self, pred, oracle, pmask=None):
        # TODO(synk): pmask is ignored, matching the original module (MSELoss
        # applies no mask).
        loss = mse_loss_pallas(pred, oracle)
        # Keep the device scalar; no blocking .item()/float() in the hot path.
        stats = RLStatistics(loss=loss, n_words=pred.shape[0])
        return loss, stats


def _rel_err(a, b):
    return abs(float(a) - float(b)) / max(1e-12, abs(float(b)))


if __name__ == "__main__":
    key = jax.random.PRNGKey(0)
    kp, ko = jax.random.split(key)

    crit = SimpleCriticLoss()

    # 1) Critic predictions: batch=8, feature dim=128 (fast path, lane-dense).
    batch, dim = 8, 128
    pred = jax.random.normal(kp, (batch, dim), dtype=jnp.float32)
    oracle = jax.random.normal(ko, (batch, dim), dtype=jnp.float32)
    loss, stats = crit(pred, oracle)
    jax.block_until_ready(loss)
    ref = jnp.mean((pred - oracle) ** 2)
    assert _rel_err(loss, ref) < 1e-5, (float(loss), float(ref))
    assert stats.n_words == batch

    # 2) Non-multiple rows/cols: exercises the lane-dense repack (tiny pad).
    pred2 = jax.random.normal(kp, (37, 48), dtype=jnp.float32)
    oracle2 = jax.random.normal(ko, (37, 48), dtype=jnp.float32)
    loss2, stats2 = crit(pred2, oracle2)
    jax.block_until_ready(loss2)
    ref2 = jnp.mean((pred2 - oracle2) ** 2)
    assert _rel_err(loss2, ref2) < 1e-5, (float(loss2), float(ref2))
    assert stats2.n_words == 37

    # 3) Larger input: exercises the tiled grid path with multi-step VMEM
    #    accumulation and in-kernel masking of the ragged last row-tile.
    pred3 = jax.random.normal(kp, (4100, 512), dtype=jnp.float32)
    oracle3 = jax.random.normal(ko, (4100, 512), dtype=jnp.float32)
    loss3, stats3 = crit(pred3, oracle3)
    jax.block_until_ready(loss3)
    ref3 = jnp.mean((pred3 - oracle3) ** 2)
    assert _rel_err(loss3, ref3) < 1e-4, (float(loss3), float(ref3))
    assert stats3.n_words == 4100

    print("KERNEL_OK")
</pallas_src>

<mosaic_0001>
module attributes {stable_mosaic.version = 11 : i64} {
  func.func @_mse_small_kernel(%arg0: memref<2x512xf32, #tpu.memory_space<vmem>>, %arg1: memref<2x512xf32, #tpu.memory_space<vmem>>, %arg2: memref<1xf32, #tpu.memory_space<smem>>) attributes {dimension_semantics = [], scalar_prefetch = 0 : i64, scratch_operands = 0 : i64, tpu.core_type = #tpu.core_type<tc>} {
    %c0 = arith.constant 0 : index
    %c0_0 = arith.constant 0 : index
    %0 = vector.load %arg0[%c0, %c0_0] : memref<2x512xf32, #tpu.memory_space<vmem>>, vector<2x512xf32>
    %c0_1 = arith.constant 0 : index
    %c0_2 = arith.constant 0 : index
    %1 = vector.load %arg1[%c0_1, %c0_2] : memref<2x512xf32, #tpu.memory_space<vmem>>, vector<2x512xf32>
    %2 = arith.subf %0, %1 : vector<2x512xf32>
    %3 = arith.mulf %2, %2 : vector<2x512xf32>
    %4 = vector.shape_cast %3 : vector<2x512xf32> to vector<1x2x512xf32>
    %cst = arith.constant dense<0.000000e+00> : vector<1xf32>
    %5 = vector.multi_reduction <add>, %4, %cst [1, 2] : vector<1x2x512xf32> to vector<1xf32>
    %6 = vector.shape_cast %5 : vector<1xf32> to vector<1x1x1xf32>
    %7 = vector.extract %6[0, 0, 0] : f32 from vector<1x1x1xf32>
    %cst_3 = arith.constant 9.765625E-4 : f32
    %8 = arith.mulf %7, %cst_3 : f32
    %c0_4 = arith.constant 0 : index
    %9 = memref.load %arg2[%c0_4] : memref<1xf32, #tpu.memory_space<smem>>
    memref.store %8, %arg2[%c0_4] : memref<1xf32, #tpu.memory_space<smem>>
    return
  }
}

</mosaic_0001>

<llo_original>
// kernel: mse_loss_pallas.1
$region0: #{mse_loss_pallas.1}
  #allocation0 [shape = 'u32[]', space=smem, size = 0x4, offset = 0x4, fixed_abs, tag = 'smem constant byte address 0x4 - core index']
  #allocation1 [shape = 'u32[144,128]{1,0:T(1,128)}', space=vmem, size = 0x12000, scoped, tag = 'internal scratch']
  %s0 = inlined_call_operand.vmem [shape: f32[2,512], index: 0, kind: input, shape index: {}]
  %s1 = inlined_call_operand.vmem [shape: f32[2,512], index: 1, kind: input, shape index: {}]
  %s2 = inlined_call_operand.hbm [shape: f32[1], index: 2, kind: output, shape index: {}]
  %s3 = sld [smem:[#allocation0]]
  $region18: #{mse_loss_pallas.1} parent=0
    _
  %s5 = ssub.s32 1, %s3
  %s6 = scalar_select 0, %s5, %s3
  $region1: #{mse_loss_pallas.1} parent=0
    #allocation2 [shape = 'u8[512]{0}', space=smem, size = 0x200, scoped, tag = 'output window, operand 0, single buffered']
    #allocation3 [shape = 's32[1]{0}', space=sflag, size = 0x4, scoped, tag = 'scoped memory for mse_loss_pallas.1']
    %7 = vsyncpa [#allocation3], 0
    // Predicated region
    $region2: #{mse_loss_pallas.1} parent=1 // pred_check
      _
    $region3: #{mse_loss_pallas.1} parent=1 // pred_check_branch
      %9 = sbr.rel (0) target = $region5
    $region4: #{mse_loss_pallas.1} parent=1 // pred_region
      _
    $region5: #{mse_loss_pallas.1} parent=1 // pred_fallthru
      _
    // Predicated region
    $region6: #{mse_loss_pallas.1} parent=1 // pred_check
      _
    $region7: #{mse_loss_pallas.1} parent=1 // pred_check_branch
      %11 = sbr.rel (0) target = $region9
    $region8: #{mse_loss_pallas.1} parent=1 // pred_region
      _
    $region9: #{mse_loss_pallas.1} parent=1 // pred_fallthru
      _
    %v12 = vld [vmem:[%s0] sm:$0xff]
    %v13 = vld [vmem:[%s1] sm:$0xff]
    %v14 = vsub.f32 %v12, %v13
    %v15 = vmul.f32 %v14, %v14
    %v17 = vcombine.high %v15, %v15
    %v19 = vunpack.c.l.s4 1983009808
    %v20 = vunpack.c.0.s8 %v19
    %v21 = vlaneseq
    %v22 = vshrl.u32 %v21, 7
    %v23 = vsub.s32 %v20, %v22
    %v24 = vrot.slane %v15, %v23
    %v26 = vunpack.c.l.s4 1983009808
    %v27 = vunpack.c.0.s8 %v26
    %v28 = vlaneseq
    %v29 = vshrl.u32 %v28, 7
    %v30 = vsub.s32 %v27, %v29
    %v31 = vrot.slane %v17, %v30
    %v32 = vcombine.high %v24, %v24
    %v33 = vcombine.high %v31, %v31
    %vm38 = vcmask 1041408
    %v39 = vsel %vm38, %v24, 0.0
    %v40 = vsel %vm38, %v32, 0.0
    %v41 = vadd.f32 %v39, %v40
    %v42 = vsel %vm38, %v31, 0.0
    %v43 = vadd.f32 %v41, %v42
    %v44 = vsel %vm38, %v33, 0.0
    %v45 = vadd.f32 %v43, %v44
    %46 = vadd.xlane.f32.xlu0 %v45
    %v47 = vpop.xlane.xlu0 %46
    %v48 = vrot.slane %v47, 4
    %v49 = vadd.f32 %v47, %v48
    %v50 = vrot.slane %v49, 2
    %v51 = vadd.f32 %v49, %v50
    %v52 = vrot.slane %v51, 1
    %v53 = vadd.f32 %v51, %v52
    %s54 = vtos %v53
    %s55 = smul.f32 %s54, 0.0009765625
    %s56 = scalar_lea.smem [#allocation2], 0
    %57 = sst [smem:[%s56]] %s55
    // Predicated region
    $region10: #{mse_loss_pallas.1} parent=1 // pred_check
      _
    $region11: #{mse_loss_pallas.1} parent=1 // pred_check_branch
      %59 = sbr.rel (0) target = $region13
    $region12: #{mse_loss_pallas.1} parent=1 // pred_region
      %s61 = ssub.s32 16, 16
      %62 = vsyncadd [#allocation3], %s61
      %65 = dma.smem_to_hbm [#allocation2], 16, %s2, [#allocation3]
    $region13: #{mse_loss_pallas.1} parent=1 // pred_fallthru
      _
    // Predicated region
    $region14: #{mse_loss_pallas.1} parent=1 // pred_check
      _
    $region15: #{mse_loss_pallas.1} parent=1 // pred_check_branch
      %67 = sbr.rel (0) target = $region17
    $region16: #{mse_loss_pallas.1} parent=1 // pred_region
      %68 = dma.done [#allocation3], 16
    $region17: #{mse_loss_pallas.1} parent=1 // pred_fallthru
      _
    %69 = sfence
    %70 = vsyncpa [#allocation3], 1

</llo_original>
